<compile_context>
chip_gen: v5e
topology: v5e:2x2
jax: 0.10.0
libtpu: 0.0.40
codegen_flags: <defaults>
</compile_context>

<pallas_src>
import functools

import jax
import jax.numpy as jnp
from jax import lax
from jax.experimental import pallas as pl
from jax.experimental.pallas import tpu as pltpu

IGNORE_INDEX = -1      # Padding.WORD_LABEL_PAD_IDX
NEG = -1e9             # pad value for the tag (lane) dimension


def _crf_llh_kernel(em_ref, tags_ref, trans_ref, exp_trans_ref,
                    tstart_ref, tend_ref, llh_ref, *, ignore_index):
    # em_ref:   [S, Bt, Tp] f32   emissions (padded tag lanes = NEG)
    # tags_ref: [S, Bt, 1]  i32   raw tags (padding = ignore_index)
    # trans_ref/exp_trans_ref: [Tp, Tp]  log transitions / exp(log transitions)
    # tstart_ref/tend_ref:     [1, Tp]
    # llh_ref:  [Bt, 128] f32     per-batch llh broadcast over lanes
    S, Bt, Tp = em_ref.shape

    trans = trans_ref[...]           # [Tp, Tp]
    exp_trans = exp_trans_ref[...]   # [Tp, Tp]  (padded rows/cols are exactly 0)
    t_start = tstart_ref[...]        # [1, Tp]
    t_end = tend_ref[...]            # [1, Tp]

    lane = lax.broadcasted_iota(jnp.int32, (Bt, Tp), 1)   # hoisted out of loop

    # ---------------- step 0 ----------------
    em0 = em_ref[0]                                        # [Bt, Tp]
    tag0 = tags_ref[0]                                     # [Bt, 1] int32
    valid0 = tag0 != ignore_index                          # [Bt, 1] bool
    oh0 = (lane == jnp.where(valid0, tag0, 0)).astype(jnp.float32)   # [Bt, Tp]
    m0 = valid0.astype(jnp.float32)

    num0 = (jnp.sum(t_start * oh0, axis=1, keepdims=True)
            + jnp.sum(em0 * oh0, axis=1, keepdims=True) * m0)        # [Bt, 1]
    log_prob0 = em0 + t_start                                        # [Bt, Tp]
    last_oh0 = oh0 * m0                                              # [Bt, Tp]

    def body(idx, carry):
        log_prob, num, last_oh = carry

        em_t = em_ref[idx]                                           # [Bt, Tp]
        tag_t = tags_ref[idx]                                        # [Bt, 1]
        valid_t = tag_t != ignore_index                              # [Bt, 1]
        oh_t = (lane == jnp.where(valid_t, tag_t, 0)).astype(jnp.float32)
        m_t = valid_t.astype(jnp.float32)

        # ---- numerator step: emissions[tag] + trans[prev_tag, tag] ----
        e_t = jnp.sum(em_t * oh_t, axis=1, keepdims=True)            # [Bt, 1]
        trans_row = jnp.dot(last_oh, trans,
                            preferred_element_type=jnp.float32)      # [Bt, Tp]
        t_sc = jnp.sum(trans_row * oh_t, axis=1, keepdims=True)      # [Bt, 1]
        num = num + (e_t + t_sc) * m_t

        # ---- denominator step: logsumexp over source tags via the MXU ----
        m = jnp.max(log_prob, axis=1, keepdims=True)                 # [Bt, 1]
        p = jnp.exp(log_prob - m)                                    # [Bt, Tp]
        s = jnp.dot(p, exp_trans, preferred_element_type=jnp.float32)
        lse = jnp.log(s) + m + em_t                                  # em hoisted
        log_prob = jnp.where(valid_t, lse, log_prob)                 # NaN-safe

        last_oh = jnp.where(valid_t, oh_t, last_oh)
        return log_prob, num, last_oh

    log_prob, num, last_oh = lax.fori_loop(
        1, S, body, (log_prob0, num0, last_oh0))

    # end-tag transition for the numerator (transition from last valid tag)
    num = num + jnp.sum(last_oh * t_end, axis=1, keepdims=True)

    # final logsumexp for the partition function
    final = log_prob + t_end
    m_fin = jnp.max(final, axis=1, keepdims=True)
    den = jnp.log(jnp.sum(jnp.exp(final - m_fin), axis=1,
                          keepdims=True)) + m_fin                    # [Bt, 1]

    llh_ref[...] = jnp.broadcast_to(num - den, llh_ref.shape)        # lane-dense


def crf_forward(emissions, tags, transitions, *, reduce=True,
                ignore_index=IGNORE_INDEX, batch_tile=8):
    """Pallas CRF forward: mean log-likelihood (reduce=True) or per-example [B]."""
    B, S, T = emissions.shape
    Tp = ((T + 127) // 128) * 128
    Bt = batch_tile
    B_pad = ((B + Bt - 1) // Bt) * Bt

    # --- pad tag lanes with NEG, then pad batch rows with zeros / ignore ---
    em = emissions.astype(jnp.float32)
    em = jnp.pad(em, ((0, 0), (0, 0), (0, Tp - T)), constant_values=NEG)
    em = jnp.pad(em, ((0, B_pad - B), (0, 0), (0, 0)))
    em = jnp.transpose(em, (1, 0, 2))                     # [S, B_pad, Tp]

    tg = jnp.pad(tags.astype(jnp.int32), ((0, B_pad - B), (0, 0)),
                 constant_values=ignore_index)
    tg = jnp.transpose(tg, (1, 0))[:, :, None]            # [S, B_pad, 1]

    # --- pre-slice / lane-pad transitions in the glue (one-time XLA ops) ---
    tr = transitions.astype(jnp.float32)
    trans_inner = jnp.full((Tp, Tp), NEG, jnp.float32).at[:T, :T].set(tr[:T, :T])
    exp_trans = jnp.exp(trans_inner)                      # padded entries -> 0
    t_start = jnp.full((1, Tp), NEG, jnp.float32).at[0, :T].set(tr[T, :T])
    t_end = jnp.full((1, Tp), NEG, jnp.float32).at[0, :T].set(tr[:T, T + 1])

    kernel = functools.partial(_crf_llh_kernel, ignore_index=ignore_index)
    out = pl.pallas_call(
        kernel,
        out_shape=jax.ShapeDtypeStruct((B_pad, 128), jnp.float32),
        grid=(B_pad // Bt,),
        in_specs=[
            pl.BlockSpec((S, Bt, Tp), lambda i: (0, i, 0)),   # emissions block
            pl.BlockSpec((S, Bt, 1), lambda i: (0, i, 0)),    # tags block
            pl.BlockSpec((Tp, Tp), lambda i: (0, 0)),         # trans
            pl.BlockSpec((Tp, Tp), lambda i: (0, 0)),         # exp(trans)
            pl.BlockSpec((1, Tp), lambda i: (0, 0)),          # start row
            pl.BlockSpec((1, Tp), lambda i: (0, 0)),          # end column
        ],
        out_specs=pl.BlockSpec((Bt, 128), lambda i: (i, 0)),
        compiler_params=pltpu.CompilerParams(
            dimension_semantics=("parallel",)),               # v7x megacore
    )(em, tg, trans_inner, exp_trans, t_start, t_end)

    llh = out[:B, 0]
    return jnp.mean(llh) if reduce else llh


def make_transitions(key, num_tags):
    """Deterministic init mirroring CRF.reset_parameters()."""
    t = jax.random.uniform(key, (num_tags + 2, num_tags + 2),
                           minval=-0.1, maxval=0.1, dtype=jnp.float32)
    t = t.at[:, num_tags].set(-10000.0)       # column of start_tag
    t = t.at[num_tags + 1, :].set(-10000.0)   # row of end_tag
    return t


def _crf_forward_ref(emissions, tags, transitions, ignore_index=IGNORE_INDEX):
    """Pure-JAX reference (mirrors the PyTorch forward) for validation."""
    B, S, T = emissions.shape
    mask = (tags != ignore_index).astype(jnp.float32)
    safe_tags = jnp.clip(tags, 0, T - 1)
    start, end = T, T + 1

    num = transitions[start, safe_tags[:, 0]]
    num = num + jnp.take_along_axis(emissions[:, 0, :],
                                    safe_tags[:, 0:1], axis=1)[:, 0] * mask[:, 0]
    for idx in range(1, S):
        e = jnp.take_along_axis(emissions[:, idx, :],
                                safe_tags[:, idx:idx + 1], axis=1)[:, 0]
        tr = transitions[safe_tags[:, idx - 1], safe_tags[:, idx]]
        num = num + (e + tr) * mask[:, idx]
    last_idx = (jnp.sum(mask, axis=1) - 1).astype(jnp.int32)
    last_tags = jnp.take_along_axis(safe_tags, last_idx[:, None], axis=1)[:, 0]
    num = num + transitions[last_tags, end]

    log_prob = emissions[:, 0, :] + transitions[start, :T][None, :]
    for idx in range(1, S):
        score = (log_prob[:, :, None] + emissions[:, idx, None, :]
                 + transitions[None, :T, :T])
        lse = jax.scipy.special.logsumexp(score, axis=1)
        mi = mask[:, idx][:, None]
        log_prob = lse * mi + log_prob * (1.0 - mi)
    log_prob = log_prob + transitions[:T, end][None, :]
    den = jax.scipy.special.logsumexp(log_prob, axis=1)
    return jnp.mean(num - den)


if __name__ == "__main__":
    B, S, T = 2, 8, 6
    key = jax.random.PRNGKey(0)
    k_em, k_tr, k_tag = jax.random.split(key, 3)

    emissions = jax.random.normal(k_em, (B, S, T), dtype=jnp.float32)
    transitions = make_transitions(k_tr, T)

    tags = jax.random.randint(k_tag, (B, S), 0, T, dtype=jnp.int32)
    # right-side padding: seq lengths [8, 5]
    seq_lens = jnp.array([8, 5], dtype=jnp.int32)
    pos = jnp.arange(S)[None, :]
    tags = jnp.where(pos < seq_lens[:, None], tags, IGNORE_INDEX)

    out = crf_forward(emissions, tags, transitions, reduce=True)
    out = jax.block_until_ready(out)

    ref = _crf_forward_ref(emissions, tags, transitions)
    assert jnp.allclose(out, ref, rtol=1e-4, atol=1e-4), (out, ref)

    # TODO(synk): _viterbi_decode (inference path) is not implemented here;
    # only the training forward (log-likelihood) is kernelized.
    print("KERNEL_OK")
</pallas_src>

<mosaic_0001>
module attributes {stable_mosaic.version = 11 : i64} {
  func.func @_crf_llh_kernel(%arg0: i32, %arg1: memref<8x8x128xf32, #tpu.memory_space<vmem>>, %arg2: memref<8x8x1xi32, #tpu.memory_space<vmem>>, %arg3: memref<128x128xf32, #tpu.memory_space<vmem>>, %arg4: memref<128x128xf32, #tpu.memory_space<vmem>>, %arg5: memref<1x128xf32, #tpu.memory_space<vmem>>, %arg6: memref<1x128xf32, #tpu.memory_space<vmem>>, %arg7: memref<8x128xf32, #tpu.memory_space<vmem>>) attributes {dimension_semantics = [#tpu.dimension_semantics<parallel>], iteration_bounds = array<i64: 1>, scalar_prefetch = 0 : i64, scratch_operands = 0 : i64, tpu.core_type = #tpu.core_type<tc>, window_params = [{transform_indices = @transform_0, window_bounds = array<i64: 8, 8, 128>}, {transform_indices = @transform_1, window_bounds = array<i64: 8, 8, 1>}, {pipeline_mode = #tpu.pipeline_mode<synchronous>, transform_indices = @transform_2, window_bounds = array<i64: 128, 128>}, {pipeline_mode = #tpu.pipeline_mode<synchronous>, transform_indices = @transform_3, window_bounds = array<i64: 128, 128>}, {pipeline_mode = #tpu.pipeline_mode<synchronous>, transform_indices = @transform_4, window_bounds = array<i64: 1, 128>}, {pipeline_mode = #tpu.pipeline_mode<synchronous>, transform_indices = @transform_5, window_bounds = array<i64: 1, 128>}, {transform_indices = @transform_6, window_bounds = array<i64: 8, 128>}]} {
    %c0 = arith.constant 0 : index
    %c0_0 = arith.constant 0 : index
    %0 = vector.load %arg3[%c0, %c0_0] : memref<128x128xf32, #tpu.memory_space<vmem>>, vector<128x128xf32>
    %c0_1 = arith.constant 0 : index
    %c0_2 = arith.constant 0 : index
    %1 = vector.load %arg4[%c0_1, %c0_2] : memref<128x128xf32, #tpu.memory_space<vmem>>, vector<128x128xf32>
    %c0_3 = arith.constant 0 : index
    %c0_4 = arith.constant 0 : index
    %2 = vector.load %arg5[%c0_3, %c0_4] : memref<1x128xf32, #tpu.memory_space<vmem>>, vector<1x128xf32>
    %c0_5 = arith.constant 0 : index
    %c0_6 = arith.constant 0 : index
    %3 = vector.load %arg6[%c0_5, %c0_6] : memref<1x128xf32, #tpu.memory_space<vmem>>, vector<1x128xf32>
    %4 = tpu.iota {dimensions = array<i32: 1>} : vector<8x128xi32>
    %c0_7 = arith.constant 0 : index
    %c0_8 = arith.constant 0 : index
    %c0_9 = arith.constant 0 : index
    %5 = vector.load %arg1[%c0_7, %c0_8, %c0_9] : memref<8x8x128xf32, #tpu.memory_space<vmem>>, vector<1x8x128xf32>
    %6 = vector.shape_cast %5 : vector<1x8x128xf32> to vector<8x128xf32>
    %c0_10 = arith.constant 0 : index
    %c0_11 = arith.constant 0 : index
    %c0_12 = arith.constant 0 : index
    %7 = vector.load %arg2[%c0_10, %c0_11, %c0_12] : memref<8x8x1xi32, #tpu.memory_space<vmem>>, vector<1x8x1xi32>
    %8 = vector.shape_cast %7 : vector<1x8x1xi32> to vector<8x1xi32>
    %c-1_i32 = arith.constant -1 : i32
    %9 = vector.broadcast %c-1_i32 : i32 to vector<8x1xi32>
    %10 = arith.cmpi ne, %8, %9 : vector<8x1xi32>
    %c0_i32 = arith.constant 0 : i32
    %11 = vector.broadcast %c0_i32 : i32 to vector<8x1xi32>
    %12 = arith.select %10, %8, %11 : vector<8x1xi1>, vector<8x1xi32>
    %13 = vector.broadcast %12 : vector<8x1xi32> to vector<8x128xi32>
    %14 = arith.cmpi eq, %4, %13 : vector<8x128xi32>
    %15 = arith.extui %14 : vector<8x128xi1> to vector<8x128xi32>
    %16 = arith.sitofp %15 : vector<8x128xi32> to vector<8x128xf32>
    %17 = arith.extui %10 : vector<8x1xi1> to vector<8x1xi32>
    %18 = arith.sitofp %17 : vector<8x1xi32> to vector<8x1xf32>
    %19 = vector.broadcast %2 : vector<1x128xf32> to vector<8x128xf32>
    %20 = arith.mulf %19, %16 : vector<8x128xf32>
    %cst = arith.constant dense<0.000000e+00> : vector<8xf32>
    %21 = vector.multi_reduction <add>, %20, %cst [1] : vector<8x128xf32> to vector<8xf32>
    %22 = vector.shape_cast %21 : vector<8xf32> to vector<8x1xf32>
    %23 = arith.mulf %6, %16 : vector<8x128xf32>
    %cst_13 = arith.constant dense<0.000000e+00> : vector<8xf32>
    %24 = vector.multi_reduction <add>, %23, %cst_13 [1] : vector<8x128xf32> to vector<8xf32>
    %25 = vector.shape_cast %24 : vector<8xf32> to vector<8x1xf32>
    %26 = arith.mulf %25, %18 : vector<8x1xf32>
    %27 = arith.addf %22, %26 : vector<8x1xf32>
    %28 = vector.broadcast %2 : vector<1x128xf32> to vector<8x128xf32>
    %29 = arith.addf %6, %28 : vector<8x128xf32>
    %30 = vector.broadcast %18 : vector<8x1xf32> to vector<8x128xf32>
    %31 = arith.mulf %16, %30 : vector<8x128xf32>
    %c1_i32 = arith.constant 1 : i32
    %c7_i32 = arith.constant 7 : i32
    %32 = arith.addi %c1_i32, %c7_i32 : i32
    %c1_i32_14 = arith.constant 1 : i32
    %33:3 = scf.for %arg8 = %c1_i32 to %32 step %c1_i32_14 iter_args(%arg9 = %29, %arg10 = %27, %arg11 = %31) -> (vector<8x128xf32>, vector<8x1xf32>, vector<8x128xf32>)  : i32 {
      %54 = arith.index_cast %arg8 : i32 to index
      %c0_21 = arith.constant 0 : index
      %c0_22 = arith.constant 0 : index
      %55 = vector.load %arg1[%54, %c0_21, %c0_22] : memref<8x8x128xf32, #tpu.memory_space<vmem>>, vector<1x8x128xf32>
      %56 = vector.shape_cast %55 : vector<1x8x128xf32> to vector<8x128xf32>
      %57 = arith.index_cast %arg8 : i32 to index
      %c0_23 = arith.constant 0 : index
      %c0_24 = arith.constant 0 : index
      %58 = vector.load %arg2[%57, %c0_23, %c0_24] : memref<8x8x1xi32, #tpu.memory_space<vmem>>, vector<1x8x1xi32>
      %59 = vector.shape_cast %58 : vector<1x8x1xi32> to vector<8x1xi32>
      %c-1_i32_25 = arith.constant -1 : i32
      %60 = vector.broadcast %c-1_i32_25 : i32 to vector<8x1xi32>
      %61 = arith.cmpi ne, %59, %60 : vector<8x1xi32>
      %c0_i32_26 = arith.constant 0 : i32
      %62 = vector.broadcast %c0_i32_26 : i32 to vector<8x1xi32>
      %63 = arith.select %61, %59, %62 : vector<8x1xi1>, vector<8x1xi32>
      %64 = vector.broadcast %63 : vector<8x1xi32> to vector<8x128xi32>
      %65 = arith.cmpi eq, %4, %64 : vector<8x128xi32>
      %66 = arith.extui %65 : vector<8x128xi1> to vector<8x128xi32>
      %67 = arith.sitofp %66 : vector<8x128xi32> to vector<8x128xf32>
      %68 = arith.extui %61 : vector<8x1xi1> to vector<8x1xi32>
      %69 = arith.sitofp %68 : vector<8x1xi32> to vector<8x1xf32>
      %70 = arith.mulf %56, %67 : vector<8x128xf32>
      %cst_27 = arith.constant dense<0.000000e+00> : vector<8xf32>
      %71 = vector.multi_reduction <add>, %70, %cst_27 [1] : vector<8x128xf32> to vector<8xf32>
      %72 = vector.shape_cast %71 : vector<8xf32> to vector<8x1xf32>
      %cst_28 = arith.constant dense<0.000000e+00> : vector<8x128xf32>
      %73 = tpu.matmul %arg11, %0, %cst_28 {dimension_numbers = #tpu.dot_dimension_numbers<[1], [0], [0], [1], [0, 0, 1, 1], [], []>} : vector<8x128xf32>, vector<128x128xf32>, vector<8x128xf32> -> vector<8x128xf32>
      %74 = arith.mulf %73, %67 : vector<8x128xf32>
      %cst_29 = arith.constant dense<0.000000e+00> : vector<8xf32>
      %75 = vector.multi_reduction <add>, %74, %cst_29 [1] : vector<8x128xf32> to vector<8xf32>
      %76 = vector.shape_cast %75 : vector<8xf32> to vector<8x1xf32>
      %77 = arith.addf %72, %76 : vector<8x1xf32>
      %78 = arith.mulf %77, %69 : vector<8x1xf32>
      %79 = arith.addf %arg10, %78 : vector<8x1xf32>
      %cst_30 = arith.constant dense<0xFF800000> : vector<8xf32>
      %80 = vector.multi_reduction <maximumf>, %arg9, %cst_30 [1] : vector<8x128xf32> to vector<8xf32>
      %81 = vector.shape_cast %80 : vector<8xf32> to vector<8x1xf32>
      %82 = vector.broadcast %81 : vector<8x1xf32> to vector<8x128xf32>
      %83 = arith.subf %arg9, %82 : vector<8x128xf32>
      %84 = math.exp %83 : vector<8x128xf32>
      %cst_31 = arith.constant dense<0.000000e+00> : vector<8x128xf32>
      %85 = tpu.matmul %84, %1, %cst_31 {dimension_numbers = #tpu.dot_dimension_numbers<[1], [0], [0], [1], [0, 0, 1, 1], [], []>} : vector<8x128xf32>, vector<128x128xf32>, vector<8x128xf32> -> vector<8x128xf32>
      %86 = math.log %85 : vector<8x128xf32>
      %87 = vector.broadcast %81 : vector<8x1xf32> to vector<8x128xf32>
      %88 = arith.addf %86, %87 : vector<8x128xf32>
      %89 = arith.addf %88, %56 : vector<8x128xf32>
      %90 = vector.shape_cast %61 : vector<8x1xi1> to vector<8x1xi1>
      %91 = vector.broadcast %90 : vector<8x1xi1> to vector<8x128xi1>
      %92 = arith.select %91, %89, %arg9 : vector<8x128xi1>, vector<8x128xf32>
      %93 = vector.shape_cast %61 : vector<8x1xi1> to vector<8x1xi1>
      %94 = vector.broadcast %93 : vector<8x1xi1> to vector<8x128xi1>
      %95 = arith.select %94, %67, %arg11 : vector<8x128xi1>, vector<8x128xf32>
      scf.yield %92, %79, %95 : vector<8x128xf32>, vector<8x1xf32>, vector<8x128xf32>
    }
    %c7_i32_15 = arith.constant 7 : i32
    %34 = vector.broadcast %3 : vector<1x128xf32> to vector<8x128xf32>
    %35 = arith.mulf %33#2, %34 : vector<8x128xf32>
    %cst_16 = arith.constant dense<0.000000e+00> : vector<8xf32>
    %36 = vector.multi_reduction <add>, %35, %cst_16 [1] : vector<8x128xf32> to vector<8xf32>
    %37 = vector.shape_cast %36 : vector<8xf32> to vector<8x1xf32>
    %38 = arith.addf %33#1, %37 : vector<8x1xf32>
    %39 = vector.broadcast %3 : vector<1x128xf32> to vector<8x128xf32>
    %40 = arith.addf %33#0, %39 : vector<8x128xf32>
    %cst_17 = arith.constant dense<0xFF800000> : vector<8xf32>
    %41 = vector.multi_reduction <maximumf>, %40, %cst_17 [1] : vector<8x128xf32> to vector<8xf32>
    %42 = vector.shape_cast %41 : vector<8xf32> to vector<8x1xf32>
    %43 = vector.broadcast %42 : vector<8x1xf32> to vector<8x128xf32>
    %44 = arith.subf %40, %43 : vector<8x128xf32>
    %45 = math.exp %44 : vector<8x128xf32>
    %cst_18 = arith.constant dense<0.000000e+00> : vector<8xf32>
    %46 = vector.multi_reduction <add>, %45, %cst_18 [1] : vector<8x128xf32> to vector<8xf32>
    %47 = vector.shape_cast %46 : vector<8xf32> to vector<8x1xf32>
    %48 = math.log %47 : vector<8x1xf32>
    %49 = arith.addf %48, %42 : vector<8x1xf32>
    %50 = arith.subf %38, %49 : vector<8x1xf32>
    %51 = vector.shape_cast %50 : vector<8x1xf32> to vector<8x1xf32>
    %52 = vector.broadcast %51 : vector<8x1xf32> to vector<8x128xf32>
    %c0_19 = arith.constant 0 : index
    %c0_20 = arith.constant 0 : index
    %53 = vector.load %arg7[%c0_19, %c0_20] : memref<8x128xf32, #tpu.memory_space<vmem>>, vector<8x128xf32>
    tpu.vector_store %arg7[%c0_19, %c0_20], %52 {strides = array<i32>} : memref<8x128xf32, #tpu.memory_space<vmem>>, vector<8x128xf32>,
    return
  }
  func.func @transform_0(%arg0: i32) -> (i32, i32, i32) {
    %c0_i32 = arith.constant 0 : i32
    %c0_i32_0 = arith.constant 0 : i32
    %c0_i32_1 = arith.constant 0 : i32
    return %c0_i32, %arg0, %c0_i32_0 : i32, i32, i32
  }
  func.func @transform_1(%arg0: i32) -> (i32, i32, i32) {
    %c0_i32 = arith.constant 0 : i32
    %c0_i32_0 = arith.constant 0 : i32
    %c0_i32_1 = arith.constant 0 : i32
    return %c0_i32, %arg0, %c0_i32_0 : i32, i32, i32
  }
  func.func @transform_2(%arg0: i32) -> (i32, i32) {
    %c0_i32 = arith.constant 0 : i32
    %c0_i32_0 = arith.constant 0 : i32
    %c0_i32_1 = arith.constant 0 : i32
    return %c0_i32, %c0_i32_0 : i32, i32
  }
  func.func @transform_3(%arg0: i32) -> (i32, i32) {
    %c0_i32 = arith.constant 0 : i32
    %c0_i32_0 = arith.constant 0 : i32
    %c0_i32_1 = arith.constant 0 : i32
    return %c0_i32, %c0_i32_0 : i32, i32
  }
  func.func @transform_4(%arg0: i32) -> (i32, i32) {
    %c0_i32 = arith.constant 0 : i32
    %c0_i32_0 = arith.constant 0 : i32
    %c0_i32_1 = arith.constant 0 : i32
    return %c0_i32, %c0_i32_0 : i32, i32
  }
  func.func @transform_5(%arg0: i32) -> (i32, i32) {
    %c0_i32 = arith.constant 0 : i32
    %c0_i32_0 = arith.constant 0 : i32
    %c0_i32_1 = arith.constant 0 : i32
    return %c0_i32, %c0_i32_0 : i32, i32
  }
  func.func @transform_6(%arg0: i32) -> (i32, i32) {
    %c0_i32 = arith.constant 0 : i32
    %c0_i32_0 = arith.constant 0 : i32
    return %arg0, %c0_i32 : i32, i32
  }
}

</mosaic_0001>

<llo_original>
// kernel: tpu_custom_call.1
$region0: #{tpu_custom_call.1}
  #allocation0 [shape = 'u32[]', space=smem, size = 0x4, offset = 0x4, fixed_abs, tag = 'smem constant byte address 0x4 - core index']
  #allocation1 [shape = 'u32[72,128]{1,0:T(1,128)}', space=vmem, size = 0x9000, scoped, tag = 'internal scratch']
  %s0 = inlined_call_operand.vmem [shape: f32[8,8,128], index: 0, kind: input, shape index: {}]
  %s1 = inlined_call_operand.vmem [shape: s32[8,8,1], index: 1, kind: input, shape index: {}]
  %s2 = inlined_call_operand.hbm [shape: f32[128,128], index: 2, kind: input, shape index: {}]
  %s3 = inlined_call_operand.hbm [shape: f32[128,128], index: 3, kind: input, shape index: {}]
  %s4 = inlined_call_operand.vmem [shape: f32[1,128], index: 4, kind: input, shape index: {}]
  %s5 = inlined_call_operand.vmem [shape: f32[1,128], index: 5, kind: input, shape index: {}]
  %s6 = inlined_call_operand.hbm [shape: f32[8,128], index: 6, kind: output, shape index: {}]
  %s7 = sld [smem:[#allocation0]]
  $region49: #{tpu_custom_call.1} parent=0
    _
  %s9 = ssub.s32 1, %s7
  %s10 = scalar_select 0, %s9, %s7
  $region1: #{tpu_custom_call.1} parent=0
    #allocation2 [shape = 'u8[65536]{0}', space=vmem, size = 0x10000, scoped, tag = 'input window, operand 2, single buffered']
    #allocation3 [shape = 's32[1]{0}', space=sflag, size = 0x4, scoped, tag = 'scoped memory for tpu_custom_call.1']
    #allocation4 [shape = 's32[1]{0}', space=sflag, size = 0x4, scoped, tag = 'scoped memory for tpu_custom_call.1']
    #allocation5 [shape = 'u8[65536]{0}', space=vmem, size = 0x10000, scoped, tag = 'input window, operand 3, single buffered']
    #allocation6 [shape = 's32[1]{0}', space=sflag, size = 0x4, scoped, tag = 'scoped memory for tpu_custom_call.1']
    #allocation7 [shape = 'u8[4096]{0}', space=vmem, size = 0x1000, scoped, tag = 'output window, operand 0, single buffered']
    %11 = vsyncpa [#allocation3], 0
    %12 = vsyncpa [#allocation6], 0
    %13 = vsyncpa [#allocation4], 0
    // Predicated region
    $region2: #{tpu_custom_call.1} parent=1 // pred_check
      _
    $region3: #{tpu_custom_call.1} parent=1 // pred_check_branch
      %15 = sbr.rel (0) target = $region5
    $region4: #{tpu_custom_call.1} parent=1 // pred_region
      _
    $region5: #{tpu_custom_call.1} parent=1 // pred_fallthru
      _
    // Predicated region
    $region6: #{tpu_custom_call.1} parent=1 // pred_check
      _
    $region7: #{tpu_custom_call.1} parent=1 // pred_check_branch
      %17 = sbr.rel (0) target = $region9
    $region8: #{tpu_custom_call.1} parent=1 // pred_region
      _
    $region9: #{tpu_custom_call.1} parent=1 // pred_fallthru
      _
    // Predicated region
    $region10: #{tpu_custom_call.1} parent=1 // pred_check
      _
    $region11: #{tpu_custom_call.1} parent=1 // pred_check_branch
      %19 = sbr.rel (0) target = $region13
    $region12: #{tpu_custom_call.1} parent=1 // pred_region
      %21 = vsyncadd [#allocation3], 0
      %s22 = sshll.u32 %s2, 4
      %s23 = int_to_ptr.hbm [resolvable:$true] %s22
      %s24 = sshll.u32 [#allocation2], 4
      %s25 = int_to_ptr.vmem [resolvable:$true] %s24
      %30 = dma.hbm_to_vmem [thread:$0]  %s23, 2048, %s25, [#allocation3], 128, 128, 8
    $region13: #{tpu_custom_call.1} parent=1 // pred_fallthru
      _
    // Predicated region
    $region14: #{tpu_custom_call.1} parent=1 // pred_check
      _
    $region15: #{tpu_custom_call.1} parent=1 // pred_check_branch
      %32 = sbr.rel (0) target = $region17
    $region16: #{tpu_custom_call.1} parent=1 // pred_region
      %34 = vsyncadd [#allocation6], 0
      %s35 = sshll.u32 %s3, 4
      %s36 = int_to_ptr.hbm [resolvable:$true] %s35
      %s37 = sshll.u32 [#allocation5], 4
      %s38 = int_to_ptr.vmem [resolvable:$true] %s37
      %43 = dma.hbm_to_vmem [thread:$0]  %s36, 2048, %s38, [#allocation6], 128, 128, 8
    $region17: #{tpu_custom_call.1} parent=1 // pred_fallthru
      _
    // Predicated region
    $region18: #{tpu_custom_call.1} parent=1 // pred_check
      _
    $region19: #{tpu_custom_call.1} parent=1 // pred_check_branch
      %45 = sbr.rel (0) target = $region21
    $region20: #{tpu_custom_call.1} parent=1 // pred_region
      _
    $region21: #{tpu_custom_call.1} parent=1 // pred_fallthru
      _
    // Predicated region
    $region22: #{tpu_custom_call.1} parent=1 // pred_check
      _
    $region23: #{tpu_custom_call.1} parent=1 // pred_check_branch
      %47 = sbr.rel (0) target = $region25
    $region24: #{tpu_custom_call.1} parent=1 // pred_region
      _
    $region25: #{tpu_custom_call.1} parent=1 // pred_fallthru
      _
    // Predicated region
    $region26: #{tpu_custom_call.1} parent=1 // pred_check
      _
    $region27: #{tpu_custom_call.1} parent=1 // pred_check_branch
      %49 = sbr.rel (0) target = $region29
    $region28: #{tpu_custom_call.1} parent=1 // pred_region
      %51 = dma.done [#allocation3], 2048
    $region29: #{tpu_custom_call.1} parent=1 // pred_fallthru
      _
    // Predicated region
    $region30: #{tpu_custom_call.1} parent=1 // pred_check
      _
    $region31: #{tpu_custom_call.1} parent=1 // pred_check_branch
      %53 = sbr.rel (0) target = $region33
    $region32: #{tpu_custom_call.1} parent=1 // pred_region
      %55 = dma.done [#allocation6], 2048
    $region33: #{tpu_custom_call.1} parent=1 // pred_fallthru
      _
    %v56 = vld [vmem:[#allocation2] sm:$0xff]
    %v57 = vld [vmem:[#allocation2 + $0x8] sm:$0xff]
    %v58 = vld [vmem:[#allocation2 + $0x10] sm:$0xff]
    %v59 = vld [vmem:[#allocation2 + $0x18] sm:$0xff]
    %v60 = vld [vmem:[#allocation2 + $0x20] sm:$0xff]
    %v61 = vld [vmem:[#allocation2 + $0x28] sm:$0xff]
    %v62 = vld [vmem:[#allocation2 + $0x30] sm:$0xff]
    %v63 = vld [vmem:[#allocation2 + $0x38] sm:$0xff]
    %v64 = vld [vmem:[#allocation2 + $0x40] sm:$0xff]
    %v65 = vld [vmem:[#allocation2 + $0x48] sm:$0xff]
    %v66 = vld [vmem:[#allocation2 + $0x50] sm:$0xff]
    %v67 = vld [vmem:[#allocation2 + $0x58] sm:$0xff]
    %v68 = vld [vmem:[#allocation2 + $0x60] sm:$0xff]
    %v69 = vld [vmem:[#allocation2 + $0x68] sm:$0xff]
    %v70 = vld [vmem:[#allocation2 + $0x70] sm:$0xff]
    %v71 = vld [vmem:[#allocation2 + $0x78] sm:$0xff]
    %v72 = vld [vmem:[#allocation5] sm:$0xff]
    %v73 = vld [vmem:[#allocation5 + $0x8] sm:$0xff]
    %v74 = vld [vmem:[#allocation5 + $0x10] sm:$0xff]
    %v75 = vld [vmem:[#allocation5 + $0x18] sm:$0xff]
    %v76 = vld [vmem:[#allocation5 + $0x20] sm:$0xff]
    %v77 = vld [vmem:[#allocation5 + $0x28] sm:$0xff]
    %v78 = vld [vmem:[#allocation5 + $0x30] sm:$0xff]
    %v79 = vld [vmem:[#allocation5 + $0x38] sm:$0xff]
    %v80 = vld [vmem:[#allocation5 + $0x40] sm:$0xff]
    %v81 = vld [vmem:[#allocation5 + $0x48] sm:$0xff]
    %v82 = vld [vmem:[#allocation5 + $0x50] sm:$0xff]
    %v83 = vld [vmem:[#allocation5 + $0x58] sm:$0xff]
    %v84 = vld [vmem:[#allocation5 + $0x60] sm:$0xff]
    %v85 = vld [vmem:[#allocation5 + $0x68] sm:$0xff]
    %v86 = vld [vmem:[#allocation5 + $0x70] sm:$0xff]
    %v87 = vld [vmem:[#allocation5 + $0x78] sm:$0xff]
    %v88 = vld [vmem:[%s4] sm:$0x1]
    %v89 = vld [vmem:[%s5] sm:$0x1]
    %v90 = vlaneseq
    %v91 = vand.u32 %v90, 127
    %v92 = vld [vmem:[%s0] sm:$0xff]
    %v93 = vld [vmem:[%s1] sm:$0xff]
    %vm94 = vcmp.ne.s32.totalorder %v93, 4294967295
    %v95 = vsel %vm94, %v93, 0
    %96 = vset.pattern.permute.xlu0 0
    %97 = vperm.xlu0 %96, %v95
    %v98 = vpop.permute.xlu0 %97
    %vm99 = vcmp.eq.s32.totalorder %v91, %v98
    %v100 = vsel %vm99, 1, 0
    %v101 = vcvt.s32.f32 %v100
    %v102 = vsel %vm94, 1, 0
    %v103 = vcvt.s32.f32 %v102
    %v105 = vperm.slane %v88, 0
    %v107 = vmul.f32 %v105, %v101
    %108 = vadd.xlane.f32.xlu0 %v107
    %v109 = vpop.xlane.xlu0 %108
    %v110 = vmul.f32 %v92, %v101
    %111 = vadd.xlane.f32.xlu0 %v110
    %v112 = vpop.xlane.xlu0 %111
    %v113 = vmul.f32 %v112, %v103
    %v114 = vadd.f32 %v109, %v113
    %v115 = vadd.f32 %v92, %v105
    %117 = vset.pattern.permute.xlu0 0
    %118 = vperm.xlu0 %117, %v103
    %v119 = vpop.permute.xlu0 %118
    %v121 = vmul.f32 %v101, %v119
    loop: start=1, step=1, limit=8
    $region34: #{tpu_custom_call.1} parent=1 // loop_pre_header
      _
    $region35: #{tpu_custom_call.1} parent=1 // loop_header
      %s123 = sphi 1, %s127
      %p124 = scmp.ge.s32.totalorder %s123, 8
      %v128 = vphi %v115, %v208
      %v129 = vphi %v114, %v174
      %v130 = vphi %v121, %v209
    $region36: #{tpu_custom_call.1} parent=1 // loop_header_branch
      %126 = sbr.rel (%p124) target = $region40
    $region37: #{tpu_custom_call.1} parent=1 // loop_body
      %s131 = smul.u32 %s123, 8
      %s132 = scalar_lea.vmem %s0, %s131
      %v133 = vld [vmem:[%s132] sm:$0xff]
      %s134 = scalar_lea.vmem %s1, %s131
      %v135 = vld [vmem:[%s134] sm:$0xff]
      %vm136 = vcmp.ne.s32.totalorder %v135, 4294967295
      %v137 = vsel %vm136, %v135, 0
      %138 = vset.pattern.permute.xlu0 0
      %139 = vperm.xlu0 %138, %v137
      %v140 = vpop.permute.xlu0 %139
      %vm141 = vcmp.eq.s32.totalorder %v91, %v140
      %v142 = vsel %vm141, 1, 0
      %v143 = vcvt.s32.f32 %v142
      %v144 = vsel %vm136, 1, 0
      %v145 = vcvt.s32.f32 %v144
      %v146 = vmul.f32 %v133, %v143
      %147 = vadd.xlane.f32.xlu0 %v146
      %v148 = vpop.xlane.xlu0 %147
      %149 = vmatpush.msra.mxu0 %v71
      %150 = vmatpush.msra.mxu0 %v70
      %151 = vmatpush.msra.mxu0 %v69
      %152 = vmatpush.msra.mxu0 %v68
      %153 = vmatpush.msra.mxu0 %v67
      %154 = vmatpush.msra.mxu0 %v66
      %155 = vmatpush.msra.mxu0 %v65
      %156 = vmatpush.msra.mxu0 %v64
      %157 = vmatpush.msra.mxu0 %v63
      %158 = vmatpush.msra.mxu0 %v62
      %159 = vmatpush.msra.mxu0 %v61
      %160 = vmatpush.msra.mxu0 %v60
      %161 = vmatpush.msra.mxu0 %v59
      %162 = vmatpush.msra.mxu0 %v58
      %163 = vmatpush.msra.mxu0 %v57
      %164 = vmatpush.msra.mxu0 %v56
      %165 = vmatmul.f32.gmra.mxu0 %v130
      %v166 = vpop.f32.mrf.mxu0
      %v167 = vadd.f32 0.0, %v166
      %168 = vdwg.mxu0
      %v169 = vmul.f32 %v167, %v143
      %170 = vadd.xlane.f32.xlu0 %v169
      %v171 = vpop.xlane.xlu0 %170
      %v172 = vadd.f32 %v148, %v171
      %v173 = vmul.f32 %v172, %v145
      %v174 = vadd.f32 %v129, %v173
      %175 = vmax.xlane.f32.xlu0 %v128
      %v176 = vpop.xlane.xlu0 %175
      %v177 = vsub.f32 %v128, %v176
      %v178 = vmul.f32 %v177, 1.442695
      %v179 = vpow.pop %v178
      %180 = vmatpush.msra.mxu0 %v87
      %181 = vmatpush.msra.mxu0 %v86
      %182 = vmatpush.msra.mxu0 %v85
      %183 = vmatpush.msra.mxu0 %v84
      %184 = vmatpush.msra.mxu0 %v83
      %185 = vmatpush.msra.mxu0 %v82
      %186 = vmatpush.msra.mxu0 %v81
      %187 = vmatpush.msra.mxu0 %v80
      %188 = vmatpush.msra.mxu0 %v79
      %189 = vmatpush.msra.mxu0 %v78
      %190 = vmatpush.msra.mxu0 %v77
      %191 = vmatpush.msra.mxu0 %v76
      %192 = vmatpush.msra.mxu0 %v75
      %193 = vmatpush.msra.mxu0 %v74
      %194 = vmatpush.msra.mxu0 %v73
      %195 = vmatpush.msra.mxu0 %v72
      %196 = vmatmul.f32.gmra.mxu0 %v179
      %v197 = vpop.f32.mrf.mxu0
      %v198 = vadd.f32 0.0, %v197
      %199 = vdwg.mxu0
      %v200 = vlog2.pop %v198
      %v201 = vmul.f32 %v200, 0.6931472
      %v202 = vadd.f32 %v201, %v176
      %v203 = vadd.f32 %v202, %v133
      %204 = vset.pattern.permute.xlu0 0
      %205 = vperm.xlu0 %204, %v144
      %v206 = vpop.permute.xlu0 %205
      %vm207 = vcmp.eq.s32.totalorder %v206, 1
      %v208 = vsel %vm207, %v203, %v128
      %v209 = vsel %vm207, %v143, %v130
    $region38: #{tpu_custom_call.1} parent=1 // loop_footer
      %s127 = sadd.s32 1, %s123
    $region39: #{tpu_custom_call.1} parent=1 // loop_footer_branch
      %122 = sbr.rel target = $region35
    $region40: #{tpu_custom_call.1} parent=1 // loop_exit
      _
    %v211 = vperm.slane %v89, 0
    %v213 = vmul.f32 %v130, %v211
    %214 = vadd.xlane.f32.xlu0 %v213
    %v215 = vpop.xlane.xlu0 %214
    %v216 = vadd.f32 %v129, %v215
    %v217 = vadd.f32 %v128, %v211
    %218 = vmax.xlane.f32.xlu0 %v217
    %v219 = vpop.xlane.xlu0 %218
    %v220 = vsub.f32 %v217, %v219
    %v221 = vmul.f32 %v220, 1.442695
    %v222 = vpow.pop %v221
    %223 = vadd.xlane.f32.xlu0 %v222
    %v224 = vpop.xlane.xlu0 %223
    %v225 = vlog2.pop %v224
    %v226 = vmul.f32 %v225, 0.6931472
    %v227 = vadd.f32 %v226, %v219
    %v228 = vsub.f32 %v216, %v227
    %230 = vset.pattern.permute.xlu0 0
    %231 = vperm.xlu0 %230, %v228
    %v232 = vpop.permute.xlu0 %231
    %234 = vst [vmem:[#allocation7] sm:$0xff] %v232
    // Predicated region
    $region41: #{tpu_custom_call.1} parent=1 // pred_check
      _
    $region42: #{tpu_custom_call.1} parent=1 // pred_check_branch
      %236 = sbr.rel (0) target = $region44
    $region43: #{tpu_custom_call.1} parent=1 // pred_region
      %238 = vsyncadd [#allocation4], 0
      %s240 = sshll.u32 [#allocation7], 4
      %s241 = int_to_ptr.vmem [resolvable:$true] %s240
      %s242 = sshll.u32 %s6, 4
      %s243 = int_to_ptr.hbm [resolvable:$true] %s242
      %245 = dma.vmem_to_hbm [thread:$0]  %s241, 128, %s243, [#allocation4]
    $region44: #{tpu_custom_call.1} parent=1 // pred_fallthru
      _
    // Predicated region
    $region45: #{tpu_custom_call.1} parent=1 // pred_check
      _
    $region46: #{tpu_custom_call.1} parent=1 // pred_check_branch
      %247 = sbr.rel (0) target = $region48
    $region47: #{tpu_custom_call.1} parent=1 // pred_region
      %249 = dma.done [#allocation4], 128
    $region48: #{tpu_custom_call.1} parent=1 // pred_fallthru
      _
    %250 = vsyncpa [#allocation3], 1
    %251 = vsyncpa [#allocation6], 1
    %252 = vsyncpa [#allocation4], 1

</llo_original>
